<compile_context>
chip_gen: v7x
topology: tpu7x:2x2x1
jax: 0.10.0
libtpu: 0.0.40
codegen_flags: <defaults>
</compile_context>

<pallas_src>
import math

import jax
import jax.numpy as jnp
from jax.experimental import pallas as pl
from jax.experimental.pallas import tpu as pltpu

_INV_SQRT2 = 0.7071067811865476        # 1 / sqrt(2)
_SQRT_2_OVER_PI = 0.7978845608028654   # sqrt(2 / pi)


def _cdiv(a, b):
    return -(-a // b)


def _round_up(x, m):
    return _cdiv(x, m) * m


def _make_kernel(gelu_variant):
    def kernel(x_ref, w_ref, b_ref, o_ref):
        # x_ref: (tm, H)  w_ref: (H, tn)  b_ref: (1, tn) f32  o_ref: (tm, tn)
        h = jnp.dot(x_ref[...], w_ref[...], preferred_element_type=jnp.float32)
        h = h + b_ref[...]                       # bias add in f32
        if gelu_variant == "tanh":
            # tanh-approx GELU: the transcendental goes to the EUP slot,
            # leaving only a handful of VPU ops under the MXU.
            u = _SQRT_2_OVER_PI * (h + 0.044715 * (h * h * h))
            act = 0.5 * h * (1.0 + jnp.tanh(u))
        else:
            # Exact BERT GELU: x * 0.5 * (1 + erf(x / sqrt(2))), division
            # folded into a multiply.
            act = h * (0.5 * (1.0 + jax.lax.erf(h * _INV_SQRT2)))
        o_ref[...] = act.astype(o_ref.dtype)

    return kernel


def bert_intermediate(hidden_states, weight_t, bias, *, tm=512,
                      compute_dtype=jnp.bfloat16, gelu="exact",
                      vmem_budget_bytes=48 * 1024 * 1024):
    """BertIntermediate forward: GELU(hidden_states @ weight_t + bias).

    hidden_states: (B, S, H); weight_t: (H, I) (transpose of the torch Linear
    weight, ideally pre-cast to `compute_dtype` at init); bias: (I,).
    compute_dtype: dtype fed to the MXU (f32 accumulation always); output
    keeps hidden_states' dtype.  gelu: "exact" (erf, module semantics) or
    "tanh" (EUP-routed approximation, recommended perf path on v6e/v7x).
    """
    B, S, H = hidden_states.shape
    Hw, I = weight_t.shape
    assert H == Hw
    M = B * S
    out_dtype = hidden_states.dtype

    x2d = hidden_states.reshape(M, H)            # free: contiguous reshape
    if compute_dtype is not None and x2d.dtype != compute_dtype:
        x2d = x2d.astype(compute_dtype)
    if compute_dtype is not None and weight_t.dtype != compute_dtype:
        # No-op if the caller pre-cast the weight at init (recommended).
        weight_t = weight_t.astype(compute_dtype)
    b2d = bias.astype(jnp.float32).reshape(1, I)  # bias stays f32

    x_item = jnp.dtype(x2d.dtype).itemsize
    w_item = jnp.dtype(weight_t.dtype).itemsize
    o_item = jnp.dtype(out_dtype).itemsize

    def _vmem_need(tm_, tn_):
        # Pipeliner allocates 2 buffers per spec (weight/bias are DMA'ed once
        # but still double-allocated).
        return 2 * (tm_ * H * x_item + H * tn_ * w_item + tn_ * 4
                    + tm_ * tn_ * o_item)

    # ---- row-tile (tm) selection ------------------------------------------
    tm = int(tm)
    if M <= tm:
        tm = M                                    # single row tile (full dim)
    else:
        tm = max(256, (tm // 256) * 256)          # multiple of 256 for the MXU

    # ---- prefer full-I weight residency (1-D grid over M) ------------------
    if _vmem_need(tm, I) <= vmem_budget_bytes:
        tn = I
    elif M > 256 and _vmem_need(256, I) <= vmem_budget_bytes:
        tm, tn = 256, I
    else:
        # Fallback: tile I on the outer grid axis; weight tile stays resident
        # across the inner M loop.  tn is a multiple of 128 (lane-dense).
        tn = 128
        while 2 * tn < I and _vmem_need(tm, 2 * tn) <= vmem_budget_bytes:
            tn *= 2

    nm = _cdiv(M, tm)
    if tn >= I and nm > 2 and nm % 2 == 1:
        # v7x has 2 TensorCores: prefer an even tile count on the parallel
        # leading axis so both cores get equal work.
        tm_even = _round_up(_cdiv(M, nm + 1), 8)
        if tm_even >= 128:
            tm = tm_even
            nm = _cdiv(M, tm)

    kernel = _make_kernel(gelu)

    if tn >= I:
        # 1-D grid: weight + bias resident for the whole kernel, x read once.
        grid = (nm,)
        in_specs = [
            pl.BlockSpec((tm, H), lambda i: (i, 0)),   # activation rows
            pl.BlockSpec((H, I), lambda i: (0, 0)),    # full weight slab
            pl.BlockSpec((1, I), lambda i: (0, 0)),    # full bias
        ]
        out_specs = pl.BlockSpec((tm, I), lambda i: (i, 0))
        dims = ("parallel",)
        x_passes = 1
    else:
        # 2-D grid, I outer / M inner: weight tile constant across inner loop.
        ni = _cdiv(I, tn)
        grid = (ni, nm)
        in_specs = [
            pl.BlockSpec((tm, H), lambda j, i: (i, 0)),
            pl.BlockSpec((H, tn), lambda j, i: (0, j)),
            pl.BlockSpec((1, tn), lambda j, i: (0, j)),
        ]
        out_specs = pl.BlockSpec((tm, tn), lambda j, i: (i, j))
        dims = ("parallel", "parallel")
        x_passes = ni

    bytes_accessed = (x_passes * M * H * x_item + H * I * w_item
                      + I * 4 + M * I * o_item)
    cost = pl.CostEstimate(
        flops=2 * M * H * I,
        transcendentals=M * I,
        bytes_accessed=int(bytes_accessed),
    )

    vmem_limit = int(min(max(_vmem_need(tm, tn) + (4 << 20), 32 << 20),
                         56 << 20))

    out2d = pl.pallas_call(
        kernel,
        out_shape=jax.ShapeDtypeStruct((M, I), out_dtype),
        grid_spec=pltpu.PrefetchScalarGridSpec(
            num_scalar_prefetch=0,
            grid=grid,
            in_specs=in_specs,
            out_specs=out_specs,
        ),
        compiler_params=pltpu.CompilerParams(
            dimension_semantics=dims,
            vmem_limit_bytes=vmem_limit,
        ),
        cost_estimate=cost,
    )(x2d, weight_t, b2d)

    return out2d.reshape(B, S, I)


def _reference(hidden_states, weight_t, bias):
    h = jnp.einsum("bsh,hi->bsi", hidden_states, weight_t) + bias
    return h * 0.5 * (1.0 + jax.lax.erf(h / math.sqrt(2.0)))


if __name__ == "__main__":
    # Small config consistent with BertIntermediate: hidden=32, intermediate=128.
    B, S, H, I = 2, 8, 32, 128

    key = jax.random.PRNGKey(0)
    kx, kw, kb = jax.random.split(key, 3)

    hidden_states = jax.random.normal(kx, (B, S, H), dtype=jnp.float32)
    # PyTorch weight shape is (I, H); we keep the transposed (H, I) layout.
    weight_t = jax.random.normal(kw, (H, I), dtype=jnp.float32) * (1.0 / math.sqrt(H))
    bias = jax.random.normal(kb, (I,), dtype=jnp.float32) * 0.02

    ref = _reference(hidden_states, weight_t, bias)

    # 1) Exact-semantics f32 path (tight tolerance vs the torch-equivalent ref).
    out = bert_intermediate(hidden_states, weight_t, bias,
                            compute_dtype=jnp.float32, gelu="exact")
    out = jax.block_until_ready(out)
    assert out.shape == (B, S, I)
    assert out.dtype == hidden_states.dtype
    assert jnp.allclose(out, ref, atol=1e-5, rtol=1e-5)

    # 2) Default production path: bf16 MXU (weight pre-cast once at "init"),
    #    f32 accumulation + f32 exact-erf epilogue.
    weight_bf16 = weight_t.astype(jnp.bfloat16)
    out_bf16 = bert_intermediate(hidden_states, weight_bf16, bias)
    out_bf16 = jax.block_until_ready(out_bf16)
    assert out_bf16.shape == (B, S, I)
    assert out_bf16.dtype == hidden_states.dtype
    assert jnp.allclose(out_bf16, ref, atol=5e-2, rtol=5e-2)

    # 3) EUP-routed tanh-approx GELU (recommended on v6e/v7x when the erf
    #    polynomial would be the VALU-saturating slot).
    out_tanh = bert_intermediate(hidden_states, weight_t, bias,
                                 compute_dtype=jnp.float32, gelu="tanh")
    out_tanh = jax.block_until_ready(out_tanh)
    assert out_tanh.shape == (B, S, I)
    assert jnp.allclose(out_tanh, ref, atol=1e-2, rtol=1e-2)

    print("KERNEL_OK")
</pallas_src>

<mosaic_0001>
module attributes {stable_mosaic.version = 11 : i64} {
  func.func @kernel(%arg0: i32, %arg1: memref<16x32xf32, #tpu.memory_space<vmem>>, %arg2: memref<32x128xf32, #tpu.memory_space<vmem>>, %arg3: memref<1x128xf32, #tpu.memory_space<vmem>>, %arg4: memref<16x128xf32, #tpu.memory_space<vmem>>) attributes {dimension_semantics = [#tpu.dimension_semantics<parallel>], iteration_bounds = array<i64: 1>, scalar_prefetch = 0 : i64, scratch_operands = 0 : i64, tpu.core_type = #tpu.core_type<tc>, window_params = [{transform_indices = @transform_0, window_bounds = array<i64: 16, 32>}, {pipeline_mode = #tpu.pipeline_mode<synchronous>, transform_indices = @transform_1, window_bounds = array<i64: 32, 128>}, {pipeline_mode = #tpu.pipeline_mode<synchronous>, transform_indices = @transform_2, window_bounds = array<i64: 1, 128>}, {transform_indices = @transform_3, window_bounds = array<i64: 16, 128>}]} {
    %c0 = arith.constant 0 : index
    %c0_0 = arith.constant 0 : index
    %0 = vector.load %arg1[%c0, %c0_0] : memref<16x32xf32, #tpu.memory_space<vmem>>, vector<16x32xf32>
    %c0_1 = arith.constant 0 : index
    %c0_2 = arith.constant 0 : index
    %1 = vector.load %arg2[%c0_1, %c0_2] : memref<32x128xf32, #tpu.memory_space<vmem>>, vector<32x128xf32>
    %cst = arith.constant dense<0.000000e+00> : vector<16x128xf32>
    %2 = tpu.matmul %0, %1, %cst {dimension_numbers = #tpu.dot_dimension_numbers<[1], [0], [0], [1], [0, 0, 1, 1], [], []>} : vector<16x32xf32>, vector<32x128xf32>, vector<16x128xf32> -> vector<16x128xf32>
    %c0_3 = arith.constant 0 : index
    %c0_4 = arith.constant 0 : index
    %3 = vector.load %arg3[%c0_3, %c0_4] : memref<1x128xf32, #tpu.memory_space<vmem>>, vector<1x128xf32>
    %4 = vector.broadcast %3 : vector<1x128xf32> to vector<16x128xf32>
    %5 = arith.addf %2, %4 : vector<16x128xf32>
    %cst_5 = arith.constant 0.707106769 : f32
    %6 = vector.broadcast %cst_5 : f32 to vector<16x128xf32>
    %7 = arith.mulf %5, %6 : vector<16x128xf32>
    %8 = math.erf %7 : vector<16x128xf32>
    %cst_6 = arith.constant 1.000000e+00 : f32
    %9 = vector.broadcast %cst_6 : f32 to vector<16x128xf32>
    %10 = arith.addf %9, %8 : vector<16x128xf32>
    %cst_7 = arith.constant 5.000000e-01 : f32
    %11 = vector.broadcast %cst_7 : f32 to vector<16x128xf32>
    %12 = arith.mulf %11, %10 : vector<16x128xf32>
    %13 = arith.mulf %5, %12 : vector<16x128xf32>
    %c0_8 = arith.constant 0 : index
    %c0_9 = arith.constant 0 : index
    %14 = vector.load %arg4[%c0_8, %c0_9] : memref<16x128xf32, #tpu.memory_space<vmem>>, vector<16x128xf32>
    tpu.vector_store %arg4[%c0_8, %c0_9], %13 {strides = array<i32>} : memref<16x128xf32, #tpu.memory_space<vmem>>, vector<16x128xf32>,
    return
  }
  func.func @transform_0(%arg0: i32) -> (i32, i32) {
    %c0_i32 = arith.constant 0 : i32
    %c0_i32_0 = arith.constant 0 : i32
    return %arg0, %c0_i32 : i32, i32
  }
  func.func @transform_1(%arg0: i32) -> (i32, i32) {
    %c0_i32 = arith.constant 0 : i32
    %c0_i32_0 = arith.constant 0 : i32
    %c0_i32_1 = arith.constant 0 : i32
    return %c0_i32, %c0_i32_0 : i32, i32
  }
  func.func @transform_2(%arg0: i32) -> (i32, i32) {
    %c0_i32 = arith.constant 0 : i32
    %c0_i32_0 = arith.constant 0 : i32
    %c0_i32_1 = arith.constant 0 : i32
    return %c0_i32, %c0_i32_0 : i32, i32
  }
  func.func @transform_3(%arg0: i32) -> (i32, i32) {
    %c0_i32 = arith.constant 0 : i32
    %c0_i32_0 = arith.constant 0 : i32
    return %arg0, %c0_i32 : i32, i32
  }
}

</mosaic_0001>

<llo_original>
// kernel: tpu_custom_call.1
$region0: #{tpu_custom_call.1}
  #allocation0 [shape = 'u32[]', space=smem, size = 0x4, offset = 0x4, fixed_abs, tag = 'smem constant byte address 0x4 - core index']
  #allocation1 [shape = 'u32[144,128]{1,0:T(1,128)}', space=vmem, size = 0x12000, scoped, tag = 'internal scratch']
  %s0 = inlined_call_operand.hbm [shape: f32[16,32], index: 0, kind: input, shape index: {}]
  %s1 = inlined_call_operand.hbm [shape: f32[32,128], index: 1, kind: input, shape index: {}]
  %s2 = inlined_call_operand.vmem [shape: f32[1,128], index: 2, kind: input, shape index: {}]
  %s3 = inlined_call_operand.hbm [shape: f32[16,128], index: 3, kind: output, shape index: {}]
  %s4 = sld [smem:[#allocation0]]
  $region30: #{tpu_custom_call.1} parent=0
    _
  %s6 = ssub.s32 1, %s4
  %s7 = scalar_select 0, %s6, %s4
  $region1: #{tpu_custom_call.1} parent=0
    #allocation2 [shape = 'u8[8192]{0}', space=vmem, size = 0x2000, scoped, tag = 'input window, operand 0, single buffered']
    #allocation3 [shape = 's32[1]{0}', space=sflag, size = 0x4, scoped, tag = 'scoped memory for tpu_custom_call.1']
    #allocation4 [shape = 's32[1]{0}', space=sflag, size = 0x4, scoped, tag = 'scoped memory for tpu_custom_call.1']
    #allocation5 [shape = 'u8[16384]{0}', space=vmem, size = 0x4000, scoped, tag = 'input window, operand 1, single buffered']
    #allocation6 [shape = 's32[1]{0}', space=sflag, size = 0x4, scoped, tag = 'scoped memory for tpu_custom_call.1']
    #allocation7 [shape = 'u8[8192]{0}', space=vmem, size = 0x2000, scoped, tag = 'output window, operand 0, single buffered']
    %8 = vsyncpa [#allocation3], 0
    %9 = vsyncpa [#allocation6], 0
    %10 = vsyncpa [#allocation4], 0
    // Predicated region
    $region2: #{tpu_custom_call.1} parent=1 // pred_check
      _
    $region3: #{tpu_custom_call.1} parent=1 // pred_check_branch
      %12 = sbr.rel (0) target = $region5
    $region4: #{tpu_custom_call.1} parent=1 // pred_region
      %s14 = ssub.s32 256, 256
      %15 = vsyncadd [#allocation3], %s14
      %s16 = sshll.u32 [#allocation2], 4
      %s17 = int_to_ptr.vmem [resolvable:$true] %s16
      %22 = dma.hbm_to_vmem [thread:$0]  %s0, 256, %s17, [#allocation3], 128, 128, 8
    $region5: #{tpu_custom_call.1} parent=1 // pred_fallthru
      _
    // Predicated region
    $region6: #{tpu_custom_call.1} parent=1 // pred_check
      _
    $region7: #{tpu_custom_call.1} parent=1 // pred_check_branch
      %24 = sbr.rel (0) target = $region9
    $region8: #{tpu_custom_call.1} parent=1 // pred_region
      %s26 = ssub.s32 512, 512
      %27 = vsyncadd [#allocation6], %s26
      %s28 = sshll.u32 [#allocation5], 4
      %s29 = int_to_ptr.vmem [resolvable:$true] %s28
      %34 = dma.hbm_to_vmem [thread:$0]  %s1, 512, %s29, [#allocation6], 128, 128, 8
    $region9: #{tpu_custom_call.1} parent=1 // pred_fallthru
      _
    // Predicated region
    $region10: #{tpu_custom_call.1} parent=1 // pred_check
      _
    $region11: #{tpu_custom_call.1} parent=1 // pred_check_branch
      %36 = sbr.rel (0) target = $region13
    $region12: #{tpu_custom_call.1} parent=1 // pred_region
      _
    $region13: #{tpu_custom_call.1} parent=1 // pred_fallthru
      _
    // Predicated region
    $region14: #{tpu_custom_call.1} parent=1 // pred_check
      _
    $region15: #{tpu_custom_call.1} parent=1 // pred_check_branch
      %38 = sbr.rel (0) target = $region17
    $region16: #{tpu_custom_call.1} parent=1 // pred_region
      %39 = dma.done [#allocation3], 256
    $region17: #{tpu_custom_call.1} parent=1 // pred_fallthru
      _
    // Predicated region
    $region18: #{tpu_custom_call.1} parent=1 // pred_check
      _
    $region19: #{tpu_custom_call.1} parent=1 // pred_check_branch
      %41 = sbr.rel (0) target = $region21
    $region20: #{tpu_custom_call.1} parent=1 // pred_region
      %42 = dma.done [#allocation6], 512
    $region21: #{tpu_custom_call.1} parent=1 // pred_fallthru
      _
    %v43 = vld [vmem:[#allocation2] sm:$0xff]
    %v44 = vld [vmem:[#allocation2 + $0x8] sm:$0xff]
    %v45 = vld [vmem:[#allocation5] sm:$0xff]
    %v46 = vld [vmem:[#allocation5 + $0x8] sm:$0xff]
    %v47 = vld [vmem:[#allocation5 + $0x10] sm:$0xff]
    %v48 = vld [vmem:[#allocation5 + $0x18] sm:$0xff]
    %v49 = vld [vmem:[%s2] sm:$0x1]
    %v51 = vlaneseq
    %v52 = vshrl.u32 %v51, 7
    %v53 = vsub.s32 0, %v52
    %v54 = vrot.slane %v49, %v53
    %vm56 = vcmask 261120
    %v58 = vsel %vm56, %v43, 0
    %v61 = vsel %vm56, %v44, 0
    %63 = vmatprep.subr.mxu0 0.0
    %64 = vmatpush1.msra.mxu0 %v45
    %65 = vmatprep.subr.mxu0 0.0
    %66 = vmatpush1.msra.mxu0 %v46
    %67 = vmatprep.subr.mxu0 0.0
    %68 = vmatpush1.msra.mxu0 %v47
    %69 = vmatprep.subr.mxu0 0.0
    %70 = vmatpush1.msra.mxu0 %v48
    %71 = vmatprep.subr.mxu0 0.0
    %72 = vmatpush1.msra.mxu0 0.0
    %73 = vmatprep.subr.mxu0 0.0
    %74 = vmatpush1.msra.mxu0 0.0
    %75 = vmatprep.subr.mxu0 0.0
    %76 = vmatpush1.msra.mxu0 0.0
    %77 = vmatprep.subr.mxu0 0.0
    %78 = vmatpush1.msra.mxu0 0.0
    %79 = vmatprep.subr.mxu0 0.0
    %80 = vmatpush1.msra.mxu0 0.0
    %81 = vmatprep.subr.mxu0 0.0
    %82 = vmatpush1.msra.mxu0 0.0
    %83 = vmatprep.subr.mxu0 0.0
    %84 = vmatpush1.msra.mxu0 0.0
    %85 = vmatprep.subr.mxu0 0.0
    %86 = vmatpush1.msra.mxu0 0.0
    %87 = vmatprep.subr.mxu0 0.0
    %88 = vmatpush1.msra.mxu0 0.0
    %89 = vmatprep.subr.mxu0 0.0
    %90 = vmatpush1.msra.mxu0 0.0
    %91 = vmatprep.subr.mxu0 0.0
    %92 = vmatpush1.msra.mxu0 0.0
    %93 = vmatprep.subr.mxu0 0.0
    %94 = vmatpush1.msra.mxu0 0.0
    %95 = vmatprep.subr.mxu0 0.0
    %96 = vmatpush1.msra.mxu0 0.0
    %97 = vmatprep.subr.mxu0 0.0
    %98 = vmatpush1.msra.mxu0 0.0
    %99 = vmatprep.subr.mxu0 0.0
    %100 = vmatpush1.msra.mxu0 0.0
    %101 = vmatprep.subr.mxu0 0.0
    %102 = vmatpush1.msra.mxu0 0.0
    %103 = vmatprep.subr.mxu0 0.0
    %104 = vmatpush1.msra.mxu0 0.0
    %105 = vmatprep.subr.mxu0 0.0
    %106 = vmatpush1.msra.mxu0 0.0
    %107 = vmatprep.subr.mxu0 0.0
    %108 = vmatpush1.msra.mxu0 0.0
    %109 = vmatprep.subr.mxu0 0.0
    %110 = vmatpush1.msra.mxu0 0.0
    %111 = vmatprep.subr.mxu0 0.0
    %112 = vmatpush1.msra.mxu0 0.0
    %113 = vmatprep.subr.mxu0 0.0
    %114 = vmatpush1.msra.mxu0 0.0
    %115 = vmatprep.subr.mxu0 0.0
    %116 = vmatpush1.msra.mxu0 0.0
    %117 = vmatprep.subr.mxu0 0.0
    %118 = vmatpush1.msra.mxu0 0.0
    %119 = vmatprep.subr.mxu0 0.0
    %120 = vmatpush1.msra.mxu0 0.0
    %121 = vmatprep.subr.mxu0 0.0
    %122 = vmatpush1.msra.mxu0 0.0
    %123 = vmatprep.subr.mxu0 0.0
    %124 = vmatpush1.msra.mxu0 0.0
    %125 = vmatprep.subr.mxu0 0.0
    %126 = vmatpush1.msra.mxu0 0.0
    %127 = vmatprep.mubr.f32.mxu0 0.0
    %128 = vmatmul.mubr.f32.gmra.mrb[0].mxu0 %v58
    %v129 = vpop.f32.mrb[0].mxu0
    %v130 = vadd.f32 %v54, %v129
    %v131 = vpop.f32.mrb[0].mxu0
    %132 = vmatprep.mubr.f32.mxu0 0.0
    %133 = vmatmul.mubr.f32.gmra.mrb[0].mxu0 %v61
    %v134 = vpop.f32.mrb[0].mxu0
    %v135 = vadd.f32 %v54, %v134
    %v136 = vpop.f32.mrb[0].mxu0
    %137 = vdwg.mxu0
    %v138 = vmul.f32 %v130, 0.70710677
    %v139 = vmul.f32 %v135, 0.70710677
    %v140 = verf.f32.pop %v138
    %v141 = verf.f32.pop %v139
    %v142 = vadd.f32 %v140, 1.0
    %v143 = vadd.f32 %v141, 1.0
    %v144 = vmul.f32 %v142, 0.5
    %v145 = vmul.f32 %v143, 0.5
    %v146 = vmul.f32 %v130, %v144
    %v147 = vmul.f32 %v135, %v145
    %148 = vst [vmem:[#allocation7] sm:$0xff] %v146
    %149 = vst [vmem:[#allocation7 + $0x8] sm:$0xff] %v147
    // Predicated region
    $region22: #{tpu_custom_call.1} parent=1 // pred_check
      _
    $region23: #{tpu_custom_call.1} parent=1 // pred_check_branch
      %151 = sbr.rel (0) target = $region25
    $region24: #{tpu_custom_call.1} parent=1 // pred_region
      %s153 = ssub.s32 256, 256
      %154 = vsyncadd [#allocation4], %s153
      %s155 = sshll.u32 [#allocation7], 4
      %s156 = int_to_ptr.vmem [resolvable:$true] %s155
      %161 = dma.vmem_to_hbm [thread:$0]  %s156, 256, %s3, [#allocation4], 128, 128, 8
    $region25: #{tpu_custom_call.1} parent=1 // pred_fallthru
      _
    // Predicated region
    $region26: #{tpu_custom_call.1} parent=1 // pred_check
      _
    $region27: #{tpu_custom_call.1} parent=1 // pred_check_branch
      %163 = sbr.rel (0) target = $region29
    $region28: #{tpu_custom_call.1} parent=1 // pred_region
      %164 = dma.done [#allocation4], 256
    $region29: #{tpu_custom_call.1} parent=1 // pred_fallthru
      _
    %165 = vsyncpa [#allocation3], 1
    %166 = vsyncpa [#allocation6], 1
    %167 = vsyncpa [#allocation4], 1

</llo_original>
